<compile_context>
chip_gen: v7x
topology: tpu7x:2x2x1
jax: 0.10.0
libtpu: 0.0.40
codegen_flags: <defaults>
</compile_context>

<pallas_src>
import jax
import jax.numpy as jnp
from jax import lax
from jax.experimental import pallas as pl
from jax.experimental.pallas import tpu as pltpu


LANE = 128


# --------------------------- fused LSTM + head kernel ------------------------
def _lstm_head_kernel(x_ref, wih_ref, whh_ref, b_ref, wf_ref, bf_ref,
                      out_ref, hseq_sc):
    # x (T, H_in); wih (H_in, 4H); whh (H, 4H); b (1, 4H);
    # wf (H, 128) = w1 @ w2_pad; bf (1, 128) = b1 @ w2_pad + b2_pad;
    # out (T, 128); hseq_sc (T, H) scratch.
    T, H = hseq_sc.shape

    # One MXU pass up front: input projection (+ hoisted bias) for ALL timesteps,
    # batch row 0 only.  (T, 4H) is a single (8,128) vreg at these shapes.
    xg = jnp.dot(x_ref[...], wih_ref[...],
                 preferred_element_type=jnp.float32) + b_ref[...]

    w_hh = whh_ref[...]                     # hoisted: loaded once, reused T times
    h = jnp.zeros((1, H), jnp.float32)      # register-resident carries
    c = jnp.zeros((1, H), jnp.float32)

    # Fully unrolled serial recurrence (T is small and static): static indices
    # -> alignment-free slices, LLO gets full scheduling visibility.
    # TODO(synk): for real wav2vec sequence lengths, chunk time on a grid axis
    # (pl.Buffered(2) on x) and switch to lax.fori_loop with partial unroll;
    # on v7x the recurrent matmul could also accumulate in the MRB instead of
    # popping then adding on the VPU.
    for t in range(T):
        # Single recurrent matmul per step; gates packed [i | f | g | o].
        gates = xg[t:t + 1, :] + jnp.dot(h, w_hh,
                                         preferred_element_type=jnp.float32)
        sig = jax.nn.sigmoid(gates)         # one EUP pass over the whole gate vreg
        th = jnp.tanh(gates)                # one EUP pass over the whole gate vreg
        i_g = sig[:, 0 * H:1 * H]
        f_g = sig[:, 1 * H:2 * H]
        g_g = th[:, 2 * H:3 * H]
        o_g = sig[:, 3 * H:4 * H]
        c = f_g * c + i_g * g_g
        h = o_g * jnp.tanh(c)
        hseq_sc[t:t + 1, :] = h             # static row store into one (8,128) tile

    # Folded dense head (dense2 o dropout o dense1): single MXU matmul and a
    # single unmasked lane-dense (T, 128) HBM writeback.
    out_ref[...] = (jnp.dot(hseq_sc[...], wf_ref[...],
                            preferred_element_type=jnp.float32)
                    + bf_ref[...]).astype(out_ref.dtype)


# --------------------------------- wrapper -----------------------------------
@jax.jit
def lstm_classification_head(features, params):
    """features: (T, B, H_in) float32, time-major; returns (T, 2) logits."""
    T, B, H_in = features.shape
    H = params["w_hh"].shape[0]
    n_out = params["w2"].shape[-1]

    # The head reads only processed_features[:, 0, :] (batch row 0 across all
    # timesteps, time-major semantics) and the LSTM never mixes batch rows, so
    # only batch row 0 needs to be computed.
    x0 = features[:, 0, :]                                    # (T, H_in)

    # Fold dense1 -> dropout (identity at eval) -> dense2 into one affine map,
    # zero-padded to a full 128-lane output so the kernel's only HBM writeback
    # is one unmasked lane-dense block.
    w2p = jnp.zeros((H, LANE), params["w2"].dtype).at[:, :n_out].set(params["w2"])
    b2p = jnp.zeros((1, LANE), params["b2"].dtype).at[:, :n_out].set(params["b2"])
    w_f = params["w1"] @ w2p                                  # (H, 128)
    b_f = params["b1"] @ w2p + b2p                            # (1, 128)

    out_padded = pl.pallas_call(
        _lstm_head_kernel,
        out_shape=jax.ShapeDtypeStruct((T, LANE), features.dtype),
        scratch_shapes=[
            pltpu.VMEM((T, H), jnp.float32),   # hidden-state sequence (batch 0)
        ],
    )(x0, params["w_ih"], params["w_hh"], params["b"], w_f, b_f)

    return out_padded[:, :n_out]


# ----------------------------- pure-JAX reference ----------------------------
def reference_forward(features, params):
    """Full-batch LSTM + unfolded dense1/dense2 (validates batch-0-only + folding)."""
    w_ih, w_hh, b = params["w_ih"], params["w_hh"], params["b"]
    B = features.shape[1]
    H = w_hh.shape[0]

    def step(carry, x_t):
        h, c = carry
        gates = x_t @ w_ih + h @ w_hh + b            # (B, 4H), packed [i|f|g|o]
        i = jax.nn.sigmoid(gates[:, 0 * H:1 * H])
        f = jax.nn.sigmoid(gates[:, 1 * H:2 * H])
        g = jnp.tanh(gates[:, 2 * H:3 * H])
        o = jax.nn.sigmoid(gates[:, 3 * H:4 * H])
        c = f * c + i * g
        h = o * jnp.tanh(c)
        return (h, c), h

    init = (jnp.zeros((B, H), jnp.float32), jnp.zeros((B, H), jnp.float32))
    _, hs = lax.scan(step, init, features)
    out = hs[:, 0, :]                                # processed_features[:, 0, :]
    out = out @ params["w1"] + params["b1"]          # dense1 (dropout = identity)
    out = out @ params["w2"] + params["b2"]          # dense2
    return out


if __name__ == "__main__":
    T, B, H_in, H = 8, 2, 16, 32   # seq=8, batch=2, config.hidden_size=16, lstm_hidden=32

    key = jax.random.PRNGKey(0)
    keys = jax.random.split(key, 8)
    scale = 1.0 / (H ** 0.5)       # PyTorch-style uniform(-1/sqrt(H), 1/sqrt(H)) init
    params = {
        # Fused gate weights, columns packed [i | f | g | o] (PyTorch gate order).
        "w_ih": jax.random.uniform(keys[0], (H_in, 4 * H), jnp.float32, -scale, scale),
        "w_hh": jax.random.uniform(keys[1], (H, 4 * H), jnp.float32, -scale, scale),
        # Combined bias (equivalent to b_ih + b_hh in PyTorch — pre-sum when
        # converting checkpoints).
        "b":    jax.random.uniform(keys[2], (1, 4 * H), jnp.float32, -scale, scale),
        "w1":   jax.random.uniform(keys[3], (H, H), jnp.float32, -scale, scale),
        "b1":   jax.random.uniform(keys[4], (1, H), jnp.float32, -scale, scale),
        "w2":   jax.random.uniform(keys[5], (H, 2), jnp.float32, -scale, scale),
        "b2":   jax.random.uniform(keys[6], (1, 2), jnp.float32, -scale, scale),
    }
    features = jax.random.normal(keys[7], (T, B, H_in), jnp.float32)

    out = lstm_classification_head(features, params)
    out = jax.block_until_ready(out)

    ref = reference_forward(features, params)
    assert out.shape == (T, 2), out.shape
    assert jnp.allclose(out, ref, atol=1e-4, rtol=1e-4), (out, ref)
    print("KERNEL_OK")
</pallas_src>

<mosaic_0001>
module attributes {stable_mosaic.version = 11 : i64} {
  func.func @_lstm_head_kernel(%arg0: memref<8x16xf32, #tpu.memory_space<vmem>>, %arg1: memref<16x128xf32, #tpu.memory_space<vmem>>, %arg2: memref<32x128xf32, #tpu.memory_space<vmem>>, %arg3: memref<1x128xf32, #tpu.memory_space<vmem>>, %arg4: memref<32x128xf32, #tpu.memory_space<vmem>>, %arg5: memref<1x128xf32, #tpu.memory_space<vmem>>, %arg6: memref<8x128xf32, #tpu.memory_space<vmem>>, %arg7: memref<8x32xf32, #tpu.memory_space<vmem>>) attributes {dimension_semantics = [], scalar_prefetch = 0 : i64, scratch_operands = 1 : i64, tpu.core_type = #tpu.core_type<tc>} {
    %c0 = arith.constant 0 : index
    %c0_0 = arith.constant 0 : index
    %0 = vector.load %arg0[%c0, %c0_0] : memref<8x16xf32, #tpu.memory_space<vmem>>, vector<8x16xf32>
    %c0_1 = arith.constant 0 : index
    %c0_2 = arith.constant 0 : index
    %1 = vector.load %arg1[%c0_1, %c0_2] : memref<16x128xf32, #tpu.memory_space<vmem>>, vector<16x128xf32>
    %cst = arith.constant dense<0.000000e+00> : vector<8x128xf32>
    %2 = tpu.matmul %0, %1, %cst {dimension_numbers = #tpu.dot_dimension_numbers<[1], [0], [0], [1], [0, 0, 1, 1], [], []>} : vector<8x16xf32>, vector<16x128xf32>, vector<8x128xf32> -> vector<8x128xf32>
    %c0_3 = arith.constant 0 : index
    %c0_4 = arith.constant 0 : index
    %3 = vector.load %arg3[%c0_3, %c0_4] : memref<1x128xf32, #tpu.memory_space<vmem>>, vector<1x128xf32>
    %4 = vector.broadcast %3 : vector<1x128xf32> to vector<8x128xf32>
    %5 = arith.addf %2, %4 : vector<8x128xf32>
    %c0_5 = arith.constant 0 : index
    %c0_6 = arith.constant 0 : index
    %6 = vector.load %arg2[%c0_5, %c0_6] : memref<32x128xf32, #tpu.memory_space<vmem>>, vector<32x128xf32>
    %cst_7 = arith.constant 0.000000e+00 : f32
    %7 = vector.broadcast %cst_7 : f32 to vector<1x32xf32>
    %cst_8 = arith.constant 0.000000e+00 : f32
    %8 = vector.broadcast %cst_8 : f32 to vector<1x32xf32>
    %9 = vector.extract_strided_slice %5 {offsets = [0, 0], sizes = [1, 128], strides = [1, 1]} : vector<8x128xf32> to vector<1x128xf32>
    %cst_9 = arith.constant dense<0.000000e+00> : vector<1x128xf32>
    %10 = tpu.matmul %7, %6, %cst_9 {dimension_numbers = #tpu.dot_dimension_numbers<[1], [0], [0], [1], [0, 0, 1, 1], [], []>} : vector<1x32xf32>, vector<32x128xf32>, vector<1x128xf32> -> vector<1x128xf32>
    %11 = arith.addf %9, %10 : vector<1x128xf32>
    %12 = arith.negf %11 : vector<1x128xf32>
    %13 = math.exp %12 : vector<1x128xf32>
    %cst_10 = arith.constant 1.000000e+00 : f32
    %14 = vector.broadcast %cst_10 : f32 to vector<1x128xf32>
    %15 = arith.addf %14, %13 : vector<1x128xf32>
    %16 = arith.divf %14, %15 : vector<1x128xf32>
    %17 = math.tanh %11 : vector<1x128xf32>
    %18 = vector.extract_strided_slice %16 {offsets = [0, 0], sizes = [1, 32], strides = [1, 1]} : vector<1x128xf32> to vector<1x32xf32>
    %19 = vector.extract_strided_slice %16 {offsets = [0, 32], sizes = [1, 32], strides = [1, 1]} : vector<1x128xf32> to vector<1x32xf32>
    %20 = vector.extract_strided_slice %17 {offsets = [0, 64], sizes = [1, 32], strides = [1, 1]} : vector<1x128xf32> to vector<1x32xf32>
    %21 = vector.extract_strided_slice %16 {offsets = [0, 96], sizes = [1, 32], strides = [1, 1]} : vector<1x128xf32> to vector<1x32xf32>
    %22 = arith.mulf %19, %8 : vector<1x32xf32>
    %23 = arith.mulf %18, %20 : vector<1x32xf32>
    %24 = arith.addf %22, %23 : vector<1x32xf32>
    %25 = math.tanh %24 : vector<1x32xf32>
    %26 = arith.mulf %21, %25 : vector<1x32xf32>
    %c0_11 = arith.constant 0 : index
    %c0_12 = arith.constant 0 : index
    %27 = vector.load %arg7[%c0_11, %c0_12] : memref<8x32xf32, #tpu.memory_space<vmem>>, vector<1x32xf32>
    tpu.vector_store %arg7[%c0_11, %c0_12], %26 {strides = array<i32>} : memref<8x32xf32, #tpu.memory_space<vmem>>, vector<1x32xf32>,
    %28 = vector.extract_strided_slice %5 {offsets = [1, 0], sizes = [1, 128], strides = [1, 1]} : vector<8x128xf32> to vector<1x128xf32>
    %cst_13 = arith.constant dense<0.000000e+00> : vector<1x128xf32>
    %29 = tpu.matmul %26, %6, %cst_13 {dimension_numbers = #tpu.dot_dimension_numbers<[1], [0], [0], [1], [0, 0, 1, 1], [], []>} : vector<1x32xf32>, vector<32x128xf32>, vector<1x128xf32> -> vector<1x128xf32>
    %30 = arith.addf %28, %29 : vector<1x128xf32>
    %31 = arith.negf %30 : vector<1x128xf32>
    %32 = math.exp %31 : vector<1x128xf32>
    %cst_14 = arith.constant 1.000000e+00 : f32
    %33 = vector.broadcast %cst_14 : f32 to vector<1x128xf32>
    %34 = arith.addf %33, %32 : vector<1x128xf32>
    %35 = arith.divf %33, %34 : vector<1x128xf32>
    %36 = math.tanh %30 : vector<1x128xf32>
    %37 = vector.extract_strided_slice %35 {offsets = [0, 0], sizes = [1, 32], strides = [1, 1]} : vector<1x128xf32> to vector<1x32xf32>
    %38 = vector.extract_strided_slice %35 {offsets = [0, 32], sizes = [1, 32], strides = [1, 1]} : vector<1x128xf32> to vector<1x32xf32>
    %39 = vector.extract_strided_slice %36 {offsets = [0, 64], sizes = [1, 32], strides = [1, 1]} : vector<1x128xf32> to vector<1x32xf32>
    %40 = vector.extract_strided_slice %35 {offsets = [0, 96], sizes = [1, 32], strides = [1, 1]} : vector<1x128xf32> to vector<1x32xf32>
    %41 = arith.mulf %38, %24 : vector<1x32xf32>
    %42 = arith.mulf %37, %39 : vector<1x32xf32>
    %43 = arith.addf %41, %42 : vector<1x32xf32>
    %44 = math.tanh %43 : vector<1x32xf32>
    %45 = arith.mulf %40, %44 : vector<1x32xf32>
    %c1 = arith.constant 1 : index
    %c0_15 = arith.constant 0 : index
    %46 = vector.load %arg7[%c1, %c0_15] : memref<8x32xf32, #tpu.memory_space<vmem>>, vector<1x32xf32>
    tpu.vector_store %arg7[%c1, %c0_15], %45 {strides = array<i32>} : memref<8x32xf32, #tpu.memory_space<vmem>>, vector<1x32xf32>,
    %47 = vector.extract_strided_slice %5 {offsets = [2, 0], sizes = [1, 128], strides = [1, 1]} : vector<8x128xf32> to vector<1x128xf32>
    %cst_16 = arith.constant dense<0.000000e+00> : vector<1x128xf32>
    %48 = tpu.matmul %45, %6, %cst_16 {dimension_numbers = #tpu.dot_dimension_numbers<[1], [0], [0], [1], [0, 0, 1, 1], [], []>} : vector<1x32xf32>, vector<32x128xf32>, vector<1x128xf32> -> vector<1x128xf32>
    %49 = arith.addf %47, %48 : vector<1x128xf32>
    %50 = arith.negf %49 : vector<1x128xf32>
    %51 = math.exp %50 : vector<1x128xf32>
    %cst_17 = arith.constant 1.000000e+00 : f32
    %52 = vector.broadcast %cst_17 : f32 to vector<1x128xf32>
    %53 = arith.addf %52, %51 : vector<1x128xf32>
    %54 = arith.divf %52, %53 : vector<1x128xf32>
    %55 = math.tanh %49 : vector<1x128xf32>
    %56 = vector.extract_strided_slice %54 {offsets = [0, 0], sizes = [1, 32], strides = [1, 1]} : vector<1x128xf32> to vector<1x32xf32>
    %57 = vector.extract_strided_slice %54 {offsets = [0, 32], sizes = [1, 32], strides = [1, 1]} : vector<1x128xf32> to vector<1x32xf32>
    %58 = vector.extract_strided_slice %55 {offsets = [0, 64], sizes = [1, 32], strides = [1, 1]} : vector<1x128xf32> to vector<1x32xf32>
    %59 = vector.extract_strided_slice %54 {offsets = [0, 96], sizes = [1, 32], strides = [1, 1]} : vector<1x128xf32> to vector<1x32xf32>
    %60 = arith.mulf %57, %43 : vector<1x32xf32>
    %61 = arith.mulf %56, %58 : vector<1x32xf32>
    %62 = arith.addf %60, %61 : vector<1x32xf32>
    %63 = math.tanh %62 : vector<1x32xf32>
    %64 = arith.mulf %59, %63 : vector<1x32xf32>
    %c2 = arith.constant 2 : index
    %c0_18 = arith.constant 0 : index
    %65 = vector.load %arg7[%c2, %c0_18] : memref<8x32xf32, #tpu.memory_space<vmem>>, vector<1x32xf32>
    tpu.vector_store %arg7[%c2, %c0_18], %64 {strides = array<i32>} : memref<8x32xf32, #tpu.memory_space<vmem>>, vector<1x32xf32>,
    %66 = vector.extract_strided_slice %5 {offsets = [3, 0], sizes = [1, 128], strides = [1, 1]} : vector<8x128xf32> to vector<1x128xf32>
    %cst_19 = arith.constant dense<0.000000e+00> : vector<1x128xf32>
    %67 = tpu.matmul %64, %6, %cst_19 {dimension_numbers = #tpu.dot_dimension_numbers<[1], [0], [0], [1], [0, 0, 1, 1], [], []>} : vector<1x32xf32>, vector<32x128xf32>, vector<1x128xf32> -> vector<1x128xf32>
    %68 = arith.addf %66, %67 : vector<1x128xf32>
    %69 = arith.negf %68 : vector<1x128xf32>
    %70 = math.exp %69 : vector<1x128xf32>
    %cst_20 = arith.constant 1.000000e+00 : f32
    %71 = vector.broadcast %cst_20 : f32 to vector<1x128xf32>
    %72 = arith.addf %71, %70 : vector<1x128xf32>
    %73 = arith.divf %71, %72 : vector<1x128xf32>
    %74 = math.tanh %68 : vector<1x128xf32>
    %75 = vector.extract_strided_slice %73 {offsets = [0, 0], sizes = [1, 32], strides = [1, 1]} : vector<1x128xf32> to vector<1x32xf32>
    %76 = vector.extract_strided_slice %73 {offsets = [0, 32], sizes = [1, 32], strides = [1, 1]} : vector<1x128xf32> to vector<1x32xf32>
    %77 = vector.extract_strided_slice %74 {offsets = [0, 64], sizes = [1, 32], strides = [1, 1]} : vector<1x128xf32> to vector<1x32xf32>
    %78 = vector.extract_strided_slice %73 {offsets = [0, 96], sizes = [1, 32], strides = [1, 1]} : vector<1x128xf32> to vector<1x32xf32>
    %79 = arith.mulf %76, %62 : vector<1x32xf32>
    %80 = arith.mulf %75, %77 : vector<1x32xf32>
    %81 = arith.addf %79, %80 : vector<1x32xf32>
    %82 = math.tanh %81 : vector<1x32xf32>
    %83 = arith.mulf %78, %82 : vector<1x32xf32>
    %c3 = arith.constant 3 : index
    %c0_21 = arith.constant 0 : index
    %84 = vector.load %arg7[%c3, %c0_21] : memref<8x32xf32, #tpu.memory_space<vmem>>, vector<1x32xf32>
    tpu.vector_store %arg7[%c3, %c0_21], %83 {strides = array<i32>} : memref<8x32xf32, #tpu.memory_space<vmem>>, vector<1x32xf32>,
    %85 = vector.extract_strided_slice %5 {offsets = [4, 0], sizes = [1, 128], strides = [1, 1]} : vector<8x128xf32> to vector<1x128xf32>
    %cst_22 = arith.constant dense<0.000000e+00> : vector<1x128xf32>
    %86 = tpu.matmul %83, %6, %cst_22 {dimension_numbers = #tpu.dot_dimension_numbers<[1], [0], [0], [1], [0, 0, 1, 1], [], []>} : vector<1x32xf32>, vector<32x128xf32>, vector<1x128xf32> -> vector<1x128xf32>
    %87 = arith.addf %85, %86 : vector<1x128xf32>
    %88 = arith.negf %87 : vector<1x128xf32>
    %89 = math.exp %88 : vector<1x128xf32>
    %cst_23 = arith.constant 1.000000e+00 : f32
    %90 = vector.broadcast %cst_23 : f32 to vector<1x128xf32>
    %91 = arith.addf %90, %89 : vector<1x128xf32>
    %92 = arith.divf %90, %91 : vector<1x128xf32>
    %93 = math.tanh %87 : vector<1x128xf32>
    %94 = vector.extract_strided_slice %92 {offsets = [0, 0], sizes = [1, 32], strides = [1, 1]} : vector<1x128xf32> to vector<1x32xf32>
    %95 = vector.extract_strided_slice %92 {offsets = [0, 32], sizes = [1, 32], strides = [1, 1]} : vector<1x128xf32> to vector<1x32xf32>
    %96 = vector.extract_strided_slice %93 {offsets = [0, 64], sizes = [1, 32], strides = [1, 1]} : vector<1x128xf32> to vector<1x32xf32>
    %97 = vector.extract_strided_slice %92 {offsets = [0, 96], sizes = [1, 32], strides = [1, 1]} : vector<1x128xf32> to vector<1x32xf32>
    %98 = arith.mulf %95, %81 : vector<1x32xf32>
    %99 = arith.mulf %94, %96 : vector<1x32xf32>
    %100 = arith.addf %98, %99 : vector<1x32xf32>
    %101 = math.tanh %100 : vector<1x32xf32>
    %102 = arith.mulf %97, %101 : vector<1x32xf32>
    %c4 = arith.constant 4 : index
    %c0_24 = arith.constant 0 : index
    %103 = vector.load %arg7[%c4, %c0_24] : memref<8x32xf32, #tpu.memory_space<vmem>>, vector<1x32xf32>
    tpu.vector_store %arg7[%c4, %c0_24], %102 {strides = array<i32>} : memref<8x32xf32, #tpu.memory_space<vmem>>, vector<1x32xf32>,
    %104 = vector.extract_strided_slice %5 {offsets = [5, 0], sizes = [1, 128], strides = [1, 1]} : vector<8x128xf32> to vector<1x128xf32>
    %cst_25 = arith.constant dense<0.000000e+00> : vector<1x128xf32>
    %105 = tpu.matmul %102, %6, %cst_25 {dimension_numbers = #tpu.dot_dimension_numbers<[1], [0], [0], [1], [0, 0, 1, 1], [], []>} : vector<1x32xf32>, vector<32x128xf32>, vector<1x128xf32> -> vector<1x128xf32>
    %106 = arith.addf %104, %105 : vector<1x128xf32>
    %107 = arith.negf %106 : vector<1x128xf32>
    %108 = math.exp %107 : vector<1x128xf32>
    %cst_26 = arith.constant 1.000000e+00 : f32
    %109 = vector.broadcast %cst_26 : f32 to vector<1x128xf32>
    %110 = arith.addf %109, %108 : vector<1x128xf32>
    %111 = arith.divf %109, %110 : vector<1x128xf32>
    %112 = math.tanh %106 : vector<1x128xf32>
    %113 = vector.extract_strided_slice %111 {offsets = [0, 0], sizes = [1, 32], strides = [1, 1]} : vector<1x128xf32> to vector<1x32xf32>
    %114 = vector.extract_strided_slice %111 {offsets = [0, 32], sizes = [1, 32], strides = [1, 1]} : vector<1x128xf32> to vector<1x32xf32>
    %115 = vector.extract_strided_slice %112 {offsets = [0, 64], sizes = [1, 32], strides = [1, 1]} : vector<1x128xf32> to vector<1x32xf32>
    %116 = vector.extract_strided_slice %111 {offsets = [0, 96], sizes = [1, 32], strides = [1, 1]} : vector<1x128xf32> to vector<1x32xf32>
    %117 = arith.mulf %114, %100 : vector<1x32xf32>
    %118 = arith.mulf %113, %115 : vector<1x32xf32>
    %119 = arith.addf %117, %118 : vector<1x32xf32>
    %120 = math.tanh %119 : vector<1x32xf32>
    %121 = arith.mulf %116, %120 : vector<1x32xf32>
    %c5 = arith.constant 5 : index
    %c0_27 = arith.constant 0 : index
    %122 = vector.load %arg7[%c5, %c0_27] : memref<8x32xf32, #tpu.memory_space<vmem>>, vector<1x32xf32>
    tpu.vector_store %arg7[%c5, %c0_27], %121 {strides = array<i32>} : memref<8x32xf32, #tpu.memory_space<vmem>>, vector<1x32xf32>,
    %123 = vector.extract_strided_slice %5 {offsets = [6, 0], sizes = [1, 128], strides = [1, 1]} : vector<8x128xf32> to vector<1x128xf32>
    %cst_28 = arith.constant dense<0.000000e+00> : vector<1x128xf32>
    %124 = tpu.matmul %121, %6, %cst_28 {dimension_numbers = #tpu.dot_dimension_numbers<[1], [0], [0], [1], [0, 0, 1, 1], [], []>} : vector<1x32xf32>, vector<32x128xf32>, vector<1x128xf32> -> vector<1x128xf32>
    %125 = arith.addf %123, %124 : vector<1x128xf32>
    %126 = arith.negf %125 : vector<1x128xf32>
    %127 = math.exp %126 : vector<1x128xf32>
    %cst_29 = arith.constant 1.000000e+00 : f32
    %128 = vector.broadcast %cst_29 : f32 to vector<1x128xf32>
    %129 = arith.addf %128, %127 : vector<1x128xf32>
    %130 = arith.divf %128, %129 : vector<1x128xf32>
    %131 = math.tanh %125 : vector<1x128xf32>
    %132 = vector.extract_strided_slice %130 {offsets = [0, 0], sizes = [1, 32], strides = [1, 1]} : vector<1x128xf32> to vector<1x32xf32>
    %133 = vector.extract_strided_slice %130 {offsets = [0, 32], sizes = [1, 32], strides = [1, 1]} : vector<1x128xf32> to vector<1x32xf32>
    %134 = vector.extract_strided_slice %131 {offsets = [0, 64], sizes = [1, 32], strides = [1, 1]} : vector<1x128xf32> to vector<1x32xf32>
    %135 = vector.extract_strided_slice %130 {offsets = [0, 96], sizes = [1, 32], strides = [1, 1]} : vector<1x128xf32> to vector<1x32xf32>
    %136 = arith.mulf %133, %119 : vector<1x32xf32>
    %137 = arith.mulf %132, %134 : vector<1x32xf32>
    %138 = arith.addf %136, %137 : vector<1x32xf32>
    %139 = math.tanh %138 : vector<1x32xf32>
    %140 = arith.mulf %135, %139 : vector<1x32xf32>
    %c6 = arith.constant 6 : index
    %c0_30 = arith.constant 0 : index
    %141 = vector.load %arg7[%c6, %c0_30] : memref<8x32xf32, #tpu.memory_space<vmem>>, vector<1x32xf32>
    tpu.vector_store %arg7[%c6, %c0_30], %140 {strides = array<i32>} : memref<8x32xf32, #tpu.memory_space<vmem>>, vector<1x32xf32>,
    %142 = vector.extract_strided_slice %5 {offsets = [7, 0], sizes = [1, 128], strides = [1, 1]} : vector<8x128xf32> to vector<1x128xf32>
    %cst_31 = arith.constant dense<0.000000e+00> : vector<1x128xf32>
    %143 = tpu.matmul %140, %6, %cst_31 {dimension_numbers = #tpu.dot_dimension_numbers<[1], [0], [0], [1], [0, 0, 1, 1], [], []>} : vector<1x32xf32>, vector<32x128xf32>, vector<1x128xf32> -> vector<1x128xf32>
    %144 = arith.addf %142, %143 : vector<1x128xf32>
    %145 = arith.negf %144 : vector<1x128xf32>
    %146 = math.exp %145 : vector<1x128xf32>
    %cst_32 = arith.constant 1.000000e+00 : f32
    %147 = vector.broadcast %cst_32 : f32 to vector<1x128xf32>
    %148 = arith.addf %147, %146 : vector<1x128xf32>
    %149 = arith.divf %147, %148 : vector<1x128xf32>
    %150 = math.tanh %144 : vector<1x128xf32>
    %151 = vector.extract_strided_slice %149 {offsets = [0, 0], sizes = [1, 32], strides = [1, 1]} : vector<1x128xf32> to vector<1x32xf32>
    %152 = vector.extract_strided_slice %149 {offsets = [0, 32], sizes = [1, 32], strides = [1, 1]} : vector<1x128xf32> to vector<1x32xf32>
    %153 = vector.extract_strided_slice %150 {offsets = [0, 64], sizes = [1, 32], strides = [1, 1]} : vector<1x128xf32> to vector<1x32xf32>
    %154 = vector.extract_strided_slice %149 {offsets = [0, 96], sizes = [1, 32], strides = [1, 1]} : vector<1x128xf32> to vector<1x32xf32>
    %155 = arith.mulf %152, %138 : vector<1x32xf32>
    %156 = arith.mulf %151, %153 : vector<1x32xf32>
    %157 = arith.addf %155, %156 : vector<1x32xf32>
    %158 = math.tanh %157 : vector<1x32xf32>
    %159 = arith.mulf %154, %158 : vector<1x32xf32>
    %c7 = arith.constant 7 : index
    %c0_33 = arith.constant 0 : index
    %160 = vector.load %arg7[%c7, %c0_33] : memref<8x32xf32, #tpu.memory_space<vmem>>, vector<1x32xf32>
    tpu.vector_store %arg7[%c7, %c0_33], %159 {strides = array<i32>} : memref<8x32xf32, #tpu.memory_space<vmem>>, vector<1x32xf32>,
    %c0_34 = arith.constant 0 : index
    %c0_35 = arith.constant 0 : index
    %161 = vector.load %arg7[%c0_34, %c0_35] : memref<8x32xf32, #tpu.memory_space<vmem>>, vector<8x32xf32>
    %c0_36 = arith.constant 0 : index
    %c0_37 = arith.constant 0 : index
    %162 = vector.load %arg4[%c0_36, %c0_37] : memref<32x128xf32, #tpu.memory_space<vmem>>, vector<32x128xf32>
    %cst_38 = arith.constant dense<0.000000e+00> : vector<8x128xf32>
    %163 = tpu.matmul %161, %162, %cst_38 {dimension_numbers = #tpu.dot_dimension_numbers<[1], [0], [0], [1], [0, 0, 1, 1], [], []>} : vector<8x32xf32>, vector<32x128xf32>, vector<8x128xf32> -> vector<8x128xf32>
    %c0_39 = arith.constant 0 : index
    %c0_40 = arith.constant 0 : index
    %164 = vector.load %arg5[%c0_39, %c0_40] : memref<1x128xf32, #tpu.memory_space<vmem>>, vector<1x128xf32>
    %165 = vector.broadcast %164 : vector<1x128xf32> to vector<8x128xf32>
    %166 = arith.addf %163, %165 : vector<8x128xf32>
    %c0_41 = arith.constant 0 : index
    %c0_42 = arith.constant 0 : index
    %167 = vector.load %arg6[%c0_41, %c0_42] : memref<8x128xf32, #tpu.memory_space<vmem>>, vector<8x128xf32>
    tpu.vector_store %arg6[%c0_41, %c0_42], %166 {strides = array<i32>} : memref<8x128xf32, #tpu.memory_space<vmem>>, vector<8x128xf32>,
    return
  }
}

</mosaic_0001>

<llo_original>
// kernel: lstm_classification_head.1
$region0: #{lstm_classification_head.1}
  #allocation0 [shape = 'u32[]', space=smem, size = 0x4, offset = 0x4, fixed_abs, tag = 'smem constant byte address 0x4 - core index']
  #allocation1 [shape = 'u32[144,128]{1,0:T(1,128)}', space=vmem, size = 0x12000, scoped, tag = 'internal scratch']
  #allocation2 [shape = 'f32[8,32]{1,0:T(8,128)}', space=vmem, size = 0x1000, scoped, tag = 'scratch operand']
  %s0 = inlined_call_operand.vmem [shape: f32[8,16], index: 0, kind: input, shape index: {}]
  %s1 = inlined_call_operand.vmem [shape: f32[16,128], index: 1, kind: input, shape index: {}]
  %s2 = inlined_call_operand.vmem [shape: f32[32,128], index: 2, kind: input, shape index: {}]
  %s3 = inlined_call_operand.vmem [shape: f32[1,128], index: 3, kind: input, shape index: {}]
  %s4 = inlined_call_operand.vmem [shape: f32[32,128], index: 4, kind: input, shape index: {}]
  %s5 = inlined_call_operand.vmem [shape: f32[1,128], index: 5, kind: input, shape index: {}]
  %s6 = inlined_call_operand.vmem [shape: f32[8,128], index: 6, kind: output, shape index: {}]
  %s7 = sld [smem:[#allocation0]]
  $region34: #{lstm_classification_head.1} parent=0
    _
  %s9 = ssub.s32 1, %s7
  %s10 = scalar_select 0, %s9, %s7
  // Predicated region
  $region2: #{lstm_classification_head.1} parent=0 // pred_check
    _
  $region3: #{lstm_classification_head.1} parent=0 // pred_check_branch
    %12 = sbr.rel (0) target = $region5
  $region4: #{lstm_classification_head.1} parent=0 // pred_region
    _
  $region5: #{lstm_classification_head.1} parent=0 // pred_fallthru
    _
  // Predicated region
  $region6: #{lstm_classification_head.1} parent=0 // pred_check
    _
  $region7: #{lstm_classification_head.1} parent=0 // pred_check_branch
    %14 = sbr.rel (0) target = $region9
  $region8: #{lstm_classification_head.1} parent=0 // pred_region
    _
  $region9: #{lstm_classification_head.1} parent=0 // pred_fallthru
    _
  // Predicated region
  $region10: #{lstm_classification_head.1} parent=0 // pred_check
    _
  $region11: #{lstm_classification_head.1} parent=0 // pred_check_branch
    %16 = sbr.rel (0) target = $region13
  $region12: #{lstm_classification_head.1} parent=0 // pred_region
    _
  $region13: #{lstm_classification_head.1} parent=0 // pred_fallthru
    _
  // Predicated region
  $region14: #{lstm_classification_head.1} parent=0 // pred_check
    _
  $region15: #{lstm_classification_head.1} parent=0 // pred_check_branch
    %18 = sbr.rel (0) target = $region17
  $region16: #{lstm_classification_head.1} parent=0 // pred_region
    _
  $region17: #{lstm_classification_head.1} parent=0 // pred_fallthru
    _
  // Predicated region
  $region18: #{lstm_classification_head.1} parent=0 // pred_check
    _
  $region19: #{lstm_classification_head.1} parent=0 // pred_check_branch
    %20 = sbr.rel (0) target = $region21
  $region20: #{lstm_classification_head.1} parent=0 // pred_region
    _
  $region21: #{lstm_classification_head.1} parent=0 // pred_fallthru
    _
  // Predicated region
  $region22: #{lstm_classification_head.1} parent=0 // pred_check
    _
  $region23: #{lstm_classification_head.1} parent=0 // pred_check_branch
    %22 = sbr.rel (0) target = $region25
  $region24: #{lstm_classification_head.1} parent=0 // pred_region
    _
  $region25: #{lstm_classification_head.1} parent=0 // pred_fallthru
    _
  %v23 = vld [vmem:[%s0] sm:$0xff]
  %v24 = vld [vmem:[%s1] sm:$0xff]
  %v25 = vld [vmem:[%s1 + $0x8] sm:$0xff]
  %v26 = vld [vmem:[%s3] sm:$0x1]
  %v28 = vlaneseq
  %v29 = vshrl.u32 %v28, 7
  %v30 = vsub.s32 0, %v29
  %v31 = vrot.slane %v26, %v30
  %vm33 = vcmask 130048
  %v35 = vsel %vm33, %v23, 0
  %37 = vmatprep.subr.mxu0 0.0
  %38 = vmatpush1.msra.mxu0 %v24
  %39 = vmatprep.subr.mxu0 0.0
  %40 = vmatpush1.msra.mxu0 %v25
  %41 = vmatprep.subr.mxu0 0.0
  %42 = vmatpush1.msra.mxu0 0.0
  %43 = vmatprep.subr.mxu0 0.0
  %44 = vmatpush1.msra.mxu0 0.0
  %45 = vmatprep.subr.mxu0 0.0
  %46 = vmatpush1.msra.mxu0 0.0
  %47 = vmatprep.subr.mxu0 0.0
  %48 = vmatpush1.msra.mxu0 0.0
  %49 = vmatprep.subr.mxu0 0.0
  %50 = vmatpush1.msra.mxu0 0.0
  %51 = vmatprep.subr.mxu0 0.0
  %52 = vmatpush1.msra.mxu0 0.0
  %53 = vmatprep.subr.mxu0 0.0
  %54 = vmatpush1.msra.mxu0 0.0
  %55 = vmatprep.subr.mxu0 0.0
  %56 = vmatpush1.msra.mxu0 0.0
  %57 = vmatprep.subr.mxu0 0.0
  %58 = vmatpush1.msra.mxu0 0.0
  %59 = vmatprep.subr.mxu0 0.0
  %60 = vmatpush1.msra.mxu0 0.0
  %61 = vmatprep.subr.mxu0 0.0
  %62 = vmatpush1.msra.mxu0 0.0
  %63 = vmatprep.subr.mxu0 0.0
  %64 = vmatpush1.msra.mxu0 0.0
  %65 = vmatprep.subr.mxu0 0.0
  %66 = vmatpush1.msra.mxu0 0.0
  %67 = vmatprep.subr.mxu0 0.0
  %68 = vmatpush1.msra.mxu0 0.0
  %69 = vmatprep.subr.mxu0 0.0
  %70 = vmatpush1.msra.mxu0 0.0
  %71 = vmatprep.subr.mxu0 0.0
  %72 = vmatpush1.msra.mxu0 0.0
  %73 = vmatprep.subr.mxu0 0.0
  %74 = vmatpush1.msra.mxu0 0.0
  %75 = vmatprep.subr.mxu0 0.0
  %76 = vmatpush1.msra.mxu0 0.0
  %77 = vmatprep.subr.mxu0 0.0
  %78 = vmatpush1.msra.mxu0 0.0
  %79 = vmatprep.subr.mxu0 0.0
  %80 = vmatpush1.msra.mxu0 0.0
  %81 = vmatprep.subr.mxu0 0.0
  %82 = vmatpush1.msra.mxu0 0.0
  %83 = vmatprep.subr.mxu0 0.0
  %84 = vmatpush1.msra.mxu0 0.0
  %85 = vmatprep.subr.mxu0 0.0
  %86 = vmatpush1.msra.mxu0 0.0
  %87 = vmatprep.subr.mxu0 0.0
  %88 = vmatpush1.msra.mxu0 0.0
  %89 = vmatprep.subr.mxu0 0.0
  %90 = vmatpush1.msra.mxu0 0.0
  %91 = vmatprep.subr.mxu0 0.0
  %92 = vmatpush1.msra.mxu0 0.0
  %93 = vmatprep.subr.mxu0 0.0
  %94 = vmatpush1.msra.mxu0 0.0
  %95 = vmatprep.subr.mxu0 0.0
  %96 = vmatpush1.msra.mxu0 0.0
  %97 = vmatprep.subr.mxu0 0.0
  %98 = vmatpush1.msra.mxu0 0.0
  %99 = vmatprep.subr.mxu0 0.0
  %100 = vmatpush1.msra.mxu0 0.0
  %101 = vmatprep.mubr.f32.mxu0 0.0
  %102 = vmatmul.mubr.f32.gmra.mrb[0].mxu0 %v35
  %v103 = vpop.f32.mrb[0].mxu0
  %v104 = vadd.f32 %v31, %v103
  %v105 = vpop.f32.mrb[0].mxu0
  %106 = vdwg.mxu0
  %v107 = vld [vmem:[%s2] sm:$0xff]
  %v108 = vld [vmem:[%s2 + $0x8] sm:$0xff]
  %v109 = vld [vmem:[%s2 + $0x10] sm:$0xff]
  %v110 = vld [vmem:[%s2 + $0x18] sm:$0xff]
  %vm111 = vcmask 261120
  %v113 = vsel %vm111, 0.0, 0
  %115 = vmatprep.subr.mxu0 0.0
  %116 = vmatpush1.msra.mxu0 %v107
  %117 = vmatprep.subr.mxu0 0.0
  %118 = vmatpush1.msra.mxu0 %v108
  %119 = vmatprep.subr.mxu0 0.0
  %120 = vmatpush1.msra.mxu0 %v109
  %121 = vmatprep.subr.mxu0 0.0
  %122 = vmatpush1.msra.mxu0 %v110
  %123 = vmatprep.subr.mxu0 0.0
  %124 = vmatpush1.msra.mxu0 0.0
  %125 = vmatprep.subr.mxu0 0.0
  %126 = vmatpush1.msra.mxu0 0.0
  %127 = vmatprep.subr.mxu0 0.0
  %128 = vmatpush1.msra.mxu0 0.0
  %129 = vmatprep.subr.mxu0 0.0
  %130 = vmatpush1.msra.mxu0 0.0
  %131 = vmatprep.subr.mxu0 0.0
  %132 = vmatpush1.msra.mxu0 0.0
  %133 = vmatprep.subr.mxu0 0.0
  %134 = vmatpush1.msra.mxu0 0.0
  %135 = vmatprep.subr.mxu0 0.0
  %136 = vmatpush1.msra.mxu0 0.0
  %137 = vmatprep.subr.mxu0 0.0
  %138 = vmatpush1.msra.mxu0 0.0
  %139 = vmatprep.subr.mxu0 0.0
  %140 = vmatpush1.msra.mxu0 0.0
  %141 = vmatprep.subr.mxu0 0.0
  %142 = vmatpush1.msra.mxu0 0.0
  %143 = vmatprep.subr.mxu0 0.0
  %144 = vmatpush1.msra.mxu0 0.0
  %145 = vmatprep.subr.mxu0 0.0
  %146 = vmatpush1.msra.mxu0 0.0
  %147 = vmatprep.subr.mxu0 0.0
  %148 = vmatpush1.msra.mxu0 0.0
  %149 = vmatprep.subr.mxu0 0.0
  %150 = vmatpush1.msra.mxu0 0.0
  %151 = vmatprep.subr.mxu0 0.0
  %152 = vmatpush1.msra.mxu0 0.0
  %153 = vmatprep.subr.mxu0 0.0
  %154 = vmatpush1.msra.mxu0 0.0
  %155 = vmatprep.subr.mxu0 0.0
  %156 = vmatpush1.msra.mxu0 0.0
  %157 = vmatprep.subr.mxu0 0.0
  %158 = vmatpush1.msra.mxu0 0.0
  %159 = vmatprep.subr.mxu0 0.0
  %160 = vmatpush1.msra.mxu0 0.0
  %161 = vmatprep.subr.mxu0 0.0
  %162 = vmatpush1.msra.mxu0 0.0
  %163 = vmatprep.subr.mxu0 0.0
  %164 = vmatpush1.msra.mxu0 0.0
  %165 = vmatprep.subr.mxu0 0.0
  %166 = vmatpush1.msra.mxu0 0.0
  %167 = vmatprep.subr.mxu0 0.0
  %168 = vmatpush1.msra.mxu0 0.0
  %169 = vmatprep.subr.mxu0 0.0
  %170 = vmatpush1.msra.mxu0 0.0
  %171 = vmatprep.subr.mxu0 0.0
  %172 = vmatpush1.msra.mxu0 0.0
  %173 = vmatprep.subr.mxu0 0.0
  %174 = vmatpush1.msra.mxu0 0.0
  %175 = vmatprep.subr.mxu0 0.0
  %176 = vmatpush1.msra.mxu0 0.0
  %177 = vmatprep.subr.mxu0 0.0
  %178 = vmatpush1.msra.mxu0 0.0
  %179 = vmatprep.mubr.f32.mxu0 0.0
  %180 = vmatmul.mubr.f32.gmra.mrb[0].mxu0 %v113
  %v181 = vpop.f32.mrb[0].mxu0
  %v182 = vadd.f32 0.0, %v181
  %v183 = vpop.f32.mrb[0].mxu0
  %184 = vdwg.mxu0
  %v185 = vadd.f32 %v104, %v182
  %v186 = vxor.u32 %v185, 2147483648
  %v187 = vmul.f32 %v186, 1.442695
  %v188 = vpow.pop %v187
  %v189 = vadd.f32 %v188, 1.0
  %v190 = vrcp.pop %v189
  %v191 = vmul.f32 1.0, %v190
  %v192 = vtanh.pop %v185
  %v193 = vmul.f32 %v191, 0.0
  %195 = vrot.lane.b32.xlu0 %v192, 64
  %v196 = vpop.permute.xlu0 %195
  %v198 = vmul.f32 %v191, %v196
  %200 = vrot.lane.b32.xlu0 %v198, 32
  %v201 = vpop.permute.xlu0 %200
  %v203 = vadd.f32 %v193, %v201
  %v204 = vtanh.pop %v203
  %206 = vrot.lane.b32.xlu0 %v204, 64
  %v207 = vpop.permute.xlu0 %206
  %v209 = vmul.f32 %v191, %v207
  %211 = vrot.lane.b32.xlu0 %v209, 32
  %v212 = vpop.permute.xlu0 %211
  %vm214 = vcmask 253952
  %215 = vst.msk [vmem:[#allocation2] sm:$0x1] %vm214, %v212
  %v216 = vsel %vm111, %v212, 0
  %218 = vmatprep.subr.mxu0 0.0
  %219 = vmatpush1.msra.mxu0 %v107
  %220 = vmatprep.subr.mxu0 0.0
  %221 = vmatpush1.msra.mxu0 %v108
  %222 = vmatprep.subr.mxu0 0.0
  %223 = vmatpush1.msra.mxu0 %v109
  %224 = vmatprep.subr.mxu0 0.0
  %225 = vmatpush1.msra.mxu0 %v110
  %226 = vmatprep.subr.mxu0 0.0
  %227 = vmatpush1.msra.mxu0 0.0
  %228 = vmatprep.subr.mxu0 0.0
  %229 = vmatpush1.msra.mxu0 0.0
  %230 = vmatprep.subr.mxu0 0.0
  %231 = vmatpush1.msra.mxu0 0.0
  %232 = vmatprep.subr.mxu0 0.0
  %233 = vmatpush1.msra.mxu0 0.0
  %234 = vmatprep.subr.mxu0 0.0
  %235 = vmatpush1.msra.mxu0 0.0
  %236 = vmatprep.subr.mxu0 0.0
  %237 = vmatpush1.msra.mxu0 0.0
  %238 = vmatprep.subr.mxu0 0.0
  %239 = vmatpush1.msra.mxu0 0.0
  %240 = vmatprep.subr.mxu0 0.0
  %241 = vmatpush1.msra.mxu0 0.0
  %242 = vmatprep.subr.mxu0 0.0
  %243 = vmatpush1.msra.mxu0 0.0
  %244 = vmatprep.subr.mxu0 0.0
  %245 = vmatpush1.msra.mxu0 0.0
  %246 = vmatprep.subr.mxu0 0.0
  %247 = vmatpush1.msra.mxu0 0.0
  %248 = vmatprep.subr.mxu0 0.0
  %249 = vmatpush1.msra.mxu0 0.0
  %250 = vmatprep.subr.mxu0 0.0
  %251 = vmatpush1.msra.mxu0 0.0
  %252 = vmatprep.subr.mxu0 0.0
  %253 = vmatpush1.msra.mxu0 0.0
  %254 = vmatprep.subr.mxu0 0.0
  %255 = vmatpush1.msra.mxu0 0.0
  %256 = vmatprep.subr.mxu0 0.0
  %257 = vmatpush1.msra.mxu0 0.0
  %258 = vmatprep.subr.mxu0 0.0
  %259 = vmatpush1.msra.mxu0 0.0
  %260 = vmatprep.subr.mxu0 0.0
  %261 = vmatpush1.msra.mxu0 0.0
  %262 = vmatprep.subr.mxu0 0.0
  %263 = vmatpush1.msra.mxu0 0.0
  %264 = vmatprep.subr.mxu0 0.0
  %265 = vmatpush1.msra.mxu0 0.0
  %266 = vmatprep.subr.mxu0 0.0
  %267 = vmatpush1.msra.mxu0 0.0
  %268 = vmatprep.subr.mxu0 0.0
  %269 = vmatpush1.msra.mxu0 0.0
  %270 = vmatprep.subr.mxu0 0.0
  %271 = vmatpush1.msra.mxu0 0.0
  %272 = vmatprep.subr.mxu0 0.0
  %273 = vmatpush1.msra.mxu0 0.0
  %274 = vmatprep.subr.mxu0 0.0
  %275 = vmatpush1.msra.mxu0 0.0
  %276 = vmatprep.subr.mxu0 0.0
  %277 = vmatpush1.msra.mxu0 0.0
  %278 = vmatprep.subr.mxu0 0.0
  %279 = vmatpush1.msra.mxu0 0.0
  %280 = vmatprep.subr.mxu0 0.0
  %281 = vmatpush1.msra.mxu0 0.0
  %282 = vmatprep.mubr.f32.mxu0 0.0
  %283 = vmatmul.mubr.f32.gmra.mrb[0].mxu0 %v216
  %v284 = vpop.f32.mrb[0].mxu0
  %v285 = vadd.f32 0.0, %v284
  %v286 = vpop.f32.mrb[0].mxu0
  %287 = vdwg.mxu0
  %v289 = vrot.slane %v285, 7
  %v291 = vadd.f32 %v104, %v289
  %v292 = vxor.u32 %v291, 2147483648
  %v293 = vmul.f32 %v292, 1.442695
  %v294 = vpow.pop %v293
  %v295 = vadd.f32 %v294, 1.0
  %v296 = vrcp.pop %v295
  %v297 = vmul.f32 1.0, %v296
  %v298 = vtanh.pop %v291
  %v300 = vrot.slane %v203, 7
  %v302 = vmul.f32 %v297, %v300
  %304 = vrot.lane.b32.xlu0 %v298, 64
  %v305 = vpop.permute.xlu0 %304
  %v307 = vmul.f32 %v297, %v305
  %309 = vrot.lane.b32.xlu0 %v307, 32
  %v310 = vpop.permute.xlu0 %309
  %v312 = vadd.f32 %v302, %v310
  %v313 = vtanh.pop %v312
  %315 = vrot.lane.b32.xlu0 %v313, 64
  %v316 = vpop.permute.xlu0 %315
  %v318 = vmul.f32 %v297, %v316
  %320 = vrot.lane.b32.xlu0 %v318, 32
  %v321 = vpop.permute.xlu0 %320
  %vm323 = vcmask 254977
  %324 = vst.msk [vmem:[#allocation2] sm:$0x2] %vm323, %v321
  %v325 = vrot.slane %v318, 1
  %326 = vrot.lane.b32.xlu0 %v325, 32
  %v327 = vpop.permute.xlu0 %326
  %v328 = vsel %vm111, %v327, 0
  %330 = vmatprep.subr.mxu0 0.0
  %331 = vmatpush1.msra.mxu0 %v107
  %332 = vmatprep.subr.mxu0 0.0
  %333 = vmatpush1.msra.mxu0 %v108
  %334 = vmatprep.subr.mxu0 0.0
  %335 = vmatpush1.msra.mxu0 %v109
  %336 = vmatprep.subr.mxu0 0.0
  %337 = vmatpush1.msra.mxu0 %v110
  %338 = vmatprep.subr.mxu0 0.0
  %339 = vmatpush1.msra.mxu0 0.0
  %340 = vmatprep.subr.mxu0 0.0
  %341 = vmatpush1.msra.mxu0 0.0
  %342 = vmatprep.subr.mxu0 0.0
  %343 = vmatpush1.msra.mxu0 0.0
  %344 = vmatprep.subr.mxu0 0.0
  %345 = vmatpush1.msra.mxu0 0.0
  %346 = vmatprep.subr.mxu0 0.0
  %347 = vmatpush1.msra.mxu0 0.0
  %348 = vmatprep.subr.mxu0 0.0
  %349 = vmatpush1.msra.mxu0 0.0
  %350 = vmatprep.subr.mxu0 0.0
  %351 = vmatpush1.msra.mxu0 0.0
  %352 = vmatprep.subr.mxu0 0.0
  %353 = vmatpush1.msra.mxu0 0.0
  %354 = vmatprep.subr.mxu0 0.0
  %355 = vmatpush1.msra.mxu0 0.0
  %356 = vmatprep.subr.mxu0 0.0
  %357 = vmatpush1.msra.mxu0 0.0
  %358 = vmatprep.subr.mxu0 0.0
  %359 = vmatpush1.msra.mxu0 0.0
  %360 = vmatprep.subr.mxu0 0.0
  %361 = vmatpush1.msra.mxu0 0.0
  %362 = vmatprep.subr.mxu0 0.0
  %363 = vmatpush1.msra.mxu0 0.0
  %364 = vmatprep.subr.mxu0 0.0
  %365 = vmatpush1.msra.mxu0 0.0
  %366 = vmatprep.subr.mxu0 0.0
  %367 = vmatpush1.msra.mxu0 0.0
  %368 = vmatprep.subr.mxu0 0.0
  %369 = vmatpush1.msra.mxu0 0.0
  %370 = vmatprep.subr.mxu0 0.0
  %371 = vmatpush1.msra.mxu0 0.0
  %372 = vmatprep.subr.mxu0 0.0
  %373 = vmatpush1.msra.mxu0 0.0
  %374 = vmatprep.subr.mxu0 0.0
  %375 = vmatpush1.msra.mxu0 0.0
  %376 = vmatprep.subr.mxu0 0.0
  %377 = vmatpush1.msra.mxu0 0.0
  %378 = vmatprep.subr.mxu0 0.0
  %379 = vmatpush1.msra.mxu0 0.0
  %380 = vmatprep.subr.mxu0 0.0
  %381 = vmatpush1.msra.mxu0 0.0
  %382 = vmatprep.subr.mxu0 0.0
  %383 = vmatpush1.msra.mxu0 0.0
  %384 = vmatprep.subr.mxu0 0.0
  %385 = vmatpush1.msra.mxu0 0.0
  %386 = vmatprep.subr.mxu0 0.0
  %387 = vmatpush1.msra.mxu0 0.0
  %388 = vmatprep.subr.mxu0 0.0
  %389 = vmatpush1.msra.mxu0 0.0
  %390 = vmatprep.subr.mxu0 0.0
  %391 = vmatpush1.msra.mxu0 0.0
  %392 = vmatprep.subr.mxu0 0.0
  %393 = vmatpush1.msra.mxu0 0.0
  %394 = vmatprep.mubr.f32.mxu0 0.0
  %395 = vmatmul.mubr.f32.gmra.mrb[0].mxu0 %v328
  %v396 = vpop.f32.mrb[0].mxu0
  %v397 = vadd.f32 0.0, %v396
  %v398 = vpop.f32.mrb[0].mxu0
  %399 = vdwg.mxu0
  %v401 = vrot.slane %v397, 6
  %v403 = vadd.f32 %v104, %v401
  %v404 = vxor.u32 %v403, 2147483648
  %v405 = vmul.f32 %v404, 1.442695
  %v406 = vpow.pop %v405
  %v407 = vadd.f32 %v406, 1.0
  %v408 = vrcp.pop %v407
  %v409 = vmul.f32 1.0, %v408
  %v410 = vtanh.pop %v403
  %v412 = vrot.slane %v312, 7
  %v414 = vmul.f32 %v409, %v412
  %416 = vrot.lane.b32.xlu0 %v410, 64
  %v417 = vpop.permute.xlu0 %416
  %v419 = vmul.f32 %v409, %v417
  %421 = vrot.lane.b32.xlu0 %v419, 32
  %v422 = vpop.permute.xlu0 %421
  %v424 = vadd.f32 %v414, %v422
  %v425 = vtanh.pop %v424
  %427 = vrot.lane.b32.xlu0 %v425, 64
  %v428 = vpop.permute.xlu0 %427
  %v430 = vmul.f32 %v409, %v428
  %432 = vrot.lane.b32.xlu0 %v430, 32
  %v433 = vpop.permute.xlu0 %432
  %vm435 = vcmask 256002
  %436 = vst.msk [vmem:[#allocation2] sm:$0x4] %vm435, %v433
  %v437 = vrot.slane %v430, 2
  %438 = vrot.lane.b32.xlu0 %v437, 32
  %v439 = vpop.permute.xlu0 %438
  %v440 = vsel %vm111, %v439, 0
  %442 = vmatprep.subr.mxu0 0.0
  %443 = vmatpush1.msra.mxu0 %v107
  %444 = vmatprep.subr.mxu0 0.0
  %445 = vmatpush1.msra.mxu0 %v108
  %446 = vmatprep.subr.mxu0 0.0
  %447 = vmatpush1.msra.mxu0 %v109
  %448 = vmatprep.subr.mxu0 0.0
  %449 = vmatpush1.msra.mxu0 %v110
  %450 = vmatprep.subr.mxu0 0.0
  %451 = vmatpush1.msra.mxu0 0.0
  %452 = vmatprep.subr.mxu0 0.0
  %453 = vmatpush1.msra.mxu0 0.0
  %454 = vmatprep.subr.mxu0 0.0
  %455 = vmatpush1.msra.mxu0 0.0
  %456 = vmatprep.subr.mxu0 0.0
  %457 = vmatpush1.msra.mxu0 0.0
  %458 = vmatprep.subr.mxu0 0.0
  %459 = vmatpush1.msra.mxu0 0.0
  %460 = vmatprep.subr.mxu0 0.0
  %461 = vmatpush1.msra.mxu0 0.0
  %462 = vmatprep.subr.mxu0 0.0
  %463 = vmatpush1.msra.mxu0 0.0
  %464 = vmatprep.subr.mxu0 0.0
  %465 = vmatpush1.msra.mxu0 0.0
  %466 = vmatprep.subr.mxu0 0.0
  %467 = vmatpush1.msra.mxu0 0.0
  %468 = vmatprep.subr.mxu0 0.0
  %469 = vmatpush1.msra.mxu0 0.0
  %470 = vmatprep.subr.mxu0 0.0
  %471 = vmatpush1.msra.mxu0 0.0
  %472 = vmatprep.subr.mxu0 0.0
  %473 = vmatpush1.msra.mxu0 0.0
  %474 = vmatprep.subr.mxu0 0.0
  %475 = vmatpush1.msra.mxu0 0.0
  %476 = vmatprep.subr.mxu0 0.0
  %477 = vmatpush1.msra.mxu0 0.0
  %478 = vmatprep.subr.mxu0 0.0
  %479 = vmatpush1.msra.mxu0 0.0
  %480 = vmatprep.subr.mxu0 0.0
  %481 = vmatpush1.msra.mxu0 0.0
  %482 = vmatprep.subr.mxu0 0.0
  %483 = vmatpush1.msra.mxu0 0.0
  %484 = vmatprep.subr.mxu0 0.0
  %485 = vmatpush1.msra.mxu0 0.0
  %486 = vmatprep.subr.mxu0 0.0
  %487 = vmatpush1.msra.mxu0 0.0
  %488 = vmatprep.subr.mxu0 0.0
  %489 = vmatpush1.msra.mxu0 0.0
  %490 = vmatprep.subr.mxu0 0.0
  %491 = vmatpush1.msra.mxu0 0.0
  %492 = vmatprep.subr.mxu0 0.0
  %493 = vmatpush1.msra.mxu0 0.0
  %494 = vmatprep.subr.mxu0 0.0
  %495 = vmatpush1.msra.mxu0 0.0
  %496 = vmatprep.subr.mxu0 0.0
  %497 = vmatpush1.msra.mxu0 0.0
  %498 = vmatprep.subr.mxu0 0.0
  %499 = vmatpush1.msra.mxu0 0.0
  %500 = vmatprep.subr.mxu0 0.0
  %501 = vmatpush1.msra.mxu0 0.0
  %502 = vmatprep.subr.mxu0 0.0
  %503 = vmatpush1.msra.mxu0 0.0
  %504 = vmatprep.subr.mxu0 0.0
  %505 = vmatpush1.msra.mxu0 0.0
  %506 = vmatprep.mubr.f32.mxu0 0.0
  %507 = vmatmul.mubr.f32.gmra.mrb[0].mxu0 %v440
  %v508 = vpop.f32.mrb[0].mxu0
  %v509 = vadd.f32 0.0, %v508
  %v510 = vpop.f32.mrb[0].mxu0
  %511 = vdwg.mxu0
  %v513 = vrot.slane %v509, 5
  %v515 = vadd.f32 %v104, %v513
  %v516 = vxor.u32 %v515, 2147483648
  %v517 = vmul.f32 %v516, 1.442695
  %v518 = vpow.pop %v517
  %v519 = vadd.f32 %v518, 1.0
  %v520 = vrcp.pop %v519
  %v521 = vmul.f32 1.0, %v520
  %v522 = vtanh.pop %v515
  %v524 = vrot.slane %v424, 7
  %v526 = vmul.f32 %v521, %v524
  %528 = vrot.lane.b32.xlu0 %v522, 64
  %v529 = vpop.permute.xlu0 %528
  %v531 = vmul.f32 %v521, %v529
  %533 = vrot.lane.b32.xlu0 %v531, 32
  %v534 = vpop.permute.xlu0 %533
  %v536 = vadd.f32 %v526, %v534
  %v537 = vtanh.pop %v536
  %539 = vrot.lane.b32.xlu0 %v537, 64
  %v540 = vpop.permute.xlu0 %539
  %v542 = vmul.f32 %v521, %v540
  %544 = vrot.lane.b32.xlu0 %v542, 32
  %v545 = vpop.permute.xlu0 %544
  %vm547 = vcmask 257027
  %548 = vst.msk [vmem:[#allocation2] sm:$0x8] %vm547, %v545
  %v549 = vrot.slane %v542, 3
  %550 = vrot.lane.b32.xlu0 %v549, 32
  %v551 = vpop.permute.xlu0 %550
  %v552 = vsel %vm111, %v551, 0
  %554 = vmatprep.subr.mxu0 0.0
  %555 = vmatpush1.msra.mxu0 %v107
  %556 = vmatprep.subr.mxu0 0.0
  %557 = vmatpush1.msra.mxu0 %v108
  %558 = vmatprep.subr.mxu0 0.0
  %559 = vmatpush1.msra.mxu0 %v109
  %560 = vmatprep.subr.mxu0 0.0
  %561 = vmatpush1.msra.mxu0 %v110
  %562 = vmatprep.subr.mxu0 0.0
  %563 = vmatpush1.msra.mxu0 0.0
  %564 = vmatprep.subr.mxu0 0.0
  %565 = vmatpush1.msra.mxu0 0.0
  %566 = vmatprep.subr.mxu0 0.0
  %567 = vmatpush1.msra.mxu0 0.0
  %568 = vmatprep.subr.mxu0 0.0
  %569 = vmatpush1.msra.mxu0 0.0
  %570 = vmatprep.subr.mxu0 0.0
  %571 = vmatpush1.msra.mxu0 0.0
  %572 = vmatprep.subr.mxu0 0.0
  %573 = vmatpush1.msra.mxu0 0.0
  %574 = vmatprep.subr.mxu0 0.0
  %575 = vmatpush1.msra.mxu0 0.0
  %576 = vmatprep.subr.mxu0 0.0
  %577 = vmatpush1.msra.mxu0 0.0
  %578 = vmatprep.subr.mxu0 0.0
  %579 = vmatpush1.msra.mxu0 0.0
  %580 = vmatprep.subr.mxu0 0.0
  %581 = vmatpush1.msra.mxu0 0.0
  %582 = vmatprep.subr.mxu0 0.0
  %583 = vmatpush1.msra.mxu0 0.0
  %584 = vmatprep.subr.mxu0 0.0
  %585 = vmatpush1.msra.mxu0 0.0
  %586 = vmatprep.subr.mxu0 0.0
  %587 = vmatpush1.msra.mxu0 0.0
  %588 = vmatprep.subr.mxu0 0.0
  %589 = vmatpush1.msra.mxu0 0.0
  %590 = vmatprep.subr.mxu0 0.0
  %591 = vmatpush1.msra.mxu0 0.0
  %592 = vmatprep.subr.mxu0 0.0
  %593 = vmatpush1.msra.mxu0 0.0
  %594 = vmatprep.subr.mxu0 0.0
  %595 = vmatpush1.msra.mxu0 0.0
  %596 = vmatprep.subr.mxu0 0.0
  %597 = vmatpush1.msra.mxu0 0.0
  %598 = vmatprep.subr.mxu0 0.0
  %599 = vmatpush1.msra.mxu0 0.0
  %600 = vmatprep.subr.mxu0 0.0
  %601 = vmatpush1.msra.mxu0 0.0
  %602 = vmatprep.subr.mxu0 0.0
  %603 = vmatpush1.msra.mxu0 0.0
  %604 = vmatprep.subr.mxu0 0.0
  %605 = vmatpush1.msra.mxu0 0.0
  %606 = vmatprep.subr.mxu0 0.0
  %607 = vmatpush1.msra.mxu0 0.0
  %608 = vmatprep.subr.mxu0 0.0
  %609 = vmatpush1.msra.mxu0 0.0
  %610 = vmatprep.subr.mxu0 0.0
  %611 = vmatpush1.msra.mxu0 0.0
  %612 = vmatprep.subr.mxu0 0.0
  %613 = vmatpush1.msra.mxu0 0.0
  %614 = vmatprep.subr.mxu0 0.0
  %615 = vmatpush1.msra.mxu0 0.0
  %616 = vmatprep.subr.mxu0 0.0
  %617 = vmatpush1.msra.mxu0 0.0
  %618 = vmatprep.mubr.f32.mxu0 0.0
  %619 = vmatmul.mubr.f32.gmra.mrb[0].mxu0 %v552
  %v620 = vpop.f32.mrb[0].mxu0
  %v621 = vadd.f32 0.0, %v620
  %v622 = vpop.f32.mrb[0].mxu0
  %623 = vdwg.mxu0
  %v625 = vrot.slane %v621, 4
  %v627 = vadd.f32 %v104, %v625
  %v628 = vxor.u32 %v627, 2147483648
  %v629 = vmul.f32 %v628, 1.442695
  %v630 = vpow.pop %v629
  %v631 = vadd.f32 %v630, 1.0
  %v632 = vrcp.pop %v631
  %v633 = vmul.f32 1.0, %v632
  %v634 = vtanh.pop %v627
  %v636 = vrot.slane %v536, 7
  %v638 = vmul.f32 %v633, %v636
  %640 = vrot.lane.b32.xlu0 %v634, 64
  %v641 = vpop.permute.xlu0 %640
  %v643 = vmul.f32 %v633, %v641
  %645 = vrot.lane.b32.xlu0 %v643, 32
  %v646 = vpop.permute.xlu0 %645
  %v648 = vadd.f32 %v638, %v646
  %v649 = vtanh.pop %v648
  %651 = vrot.lane.b32.xlu0 %v649, 64
  %v652 = vpop.permute.xlu0 %651
  %v654 = vmul.f32 %v633, %v652
  %656 = vrot.lane.b32.xlu0 %v654, 32
  %v657 = vpop.permute.xlu0 %656
  %vm659 = vcmask 258052
  %660 = vst.msk [vmem:[#allocation2] sm:$0x10] %vm659, %v657
  %v661 = vrot.slane %v654, 4
  %662 = vrot.lane.b32.xlu0 %v661, 32
  %v663 = vpop.permute.xlu0 %662
  %v664 = vsel %vm111, %v663, 0
  %666 = vmatprep.subr.mxu0 0.0
  %667 = vmatpush1.msra.mxu0 %v107
  %668 = vmatprep.subr.mxu0 0.0
  %669 = vmatpush1.msra.mxu0 %v108
  %670 = vmatprep.subr.mxu0 0.0
  %671 = vmatpush1.msra.mxu0 %v109
  %672 = vmatprep.subr.mxu0 0.0
  %673 = vmatpush1.msra.mxu0 %v110
  %674 = vmatprep.subr.mxu0 0.0
  %675 = vmatpush1.msra.mxu0 0.0
  %676 = vmatprep.subr.mxu0 0.0
  %677 = vmatpush1.msra.mxu0 0.0
  %678 = vmatprep.subr.mxu0 0.0
  %679 = vmatpush1.msra.mxu0 0.0
  %680 = vmatprep.subr.mxu0 0.0
  %681 = vmatpush1.msra.mxu0 0.0
  %682 = vmatprep.subr.mxu0 0.0
  %683 = vmatpush1.msra.mxu0 0.0
  %684 = vmatprep.subr.mxu0 0.0
  %685 = vmatpush1.msra.mxu0 0.0
  %686 = vmatprep.subr.mxu0 0.0
  %687 = vmatpush1.msra.mxu0 0.0
  %688 = vmatprep.subr.mxu0 0.0
  %689 = vmatpush1.msra.mxu0 0.0
  %690 = vmatprep.subr.mxu0 0.0
  %691 = vmatpush1.msra.mxu0 0.0
  %692 = vmatprep.subr.mxu0 0.0
  %693 = vmatpush1.msra.mxu0 0.0
  %694 = vmatprep.subr.mxu0 0.0
  %695 = vmatpush1.msra.mxu0 0.0
  %696 = vmatprep.subr.mxu0 0.0
  %697 = vmatpush1.msra.mxu0 0.0
  %698 = vmatprep.subr.mxu0 0.0
  %699 = vmatpush1.msra.mxu0 0.0
  %700 = vmatprep.subr.mxu0 0.0
  %701 = vmatpush1.msra.mxu0 0.0
  %702 = vmatprep.subr.mxu0 0.0
  %703 = vmatpush1.msra.mxu0 0.0
  %704 = vmatprep.subr.mxu0 0.0
  %705 = vmatpush1.msra.mxu0 0.0
  %706 = vmatprep.subr.mxu0 0.0
  %707 = vmatpush1.msra.mxu0 0.0
  %708 = vmatprep.subr.mxu0 0.0
  %709 = vmatpush1.msra.mxu0 0.0
  %710 = vmatprep.subr.mxu0 0.0
  %711 = vmatpush1.msra.mxu0 0.0
  %712 = vmatprep.subr.mxu0 0.0
  %713 = vmatpush1.msra.mxu0 0.0
  %714 = vmatprep.subr.mxu0 0.0
  %715 = vmatpush1.msra.mxu0 0.0
  %716 = vmatprep.subr.mxu0 0.0
  %717 = vmatpush1.msra.mxu0 0.0
  %718 = vmatprep.subr.mxu0 0.0
  %719 = vmatpush1.msra.mxu0 0.0
  %720 = vmatprep.subr.mxu0 0.0
  %721 = vmatpush1.msra.mxu0 0.0
  %722 = vmatprep.subr.mxu0 0.0
  %723 = vmatpush1.msra.mxu0 0.0
  %724 = vmatprep.subr.mxu0 0.0
  %725 = vmatpush1.msra.mxu0 0.0
  %726 = vmatprep.subr.mxu0 0.0
  %727 = vmatpush1.msra.mxu0 0.0
  %728 = vmatprep.subr.mxu0 0.0
  %729 = vmatpush1.msra.mxu0 0.0
  %730 = vmatprep.mubr.f32.mxu0 0.0
  %731 = vmatmul.mubr.f32.gmra.mrb[0].mxu0 %v664
  %v732 = vpop.f32.mrb[0].mxu0
  %v733 = vadd.f32 0.0, %v732
  %v734 = vpop.f32.mrb[0].mxu0
  %735 = vdwg.mxu0
  %v737 = vrot.slane %v733, 3
  %v739 = vadd.f32 %v104, %v737
  %v740 = vxor.u32 %v739, 2147483648
  %v741 = vmul.f32 %v740, 1.442695
  %v742 = vpow.pop %v741
  %v743 = vadd.f32 %v742, 1.0
  %v744 = vrcp.pop %v743
  %v745 = vmul.f32 1.0, %v744
  %v746 = vtanh.pop %v739
  %v748 = vrot.slane %v648, 7
  %v750 = vmul.f32 %v745, %v748
  %752 = vrot.lane.b32.xlu0 %v746, 64
  %v753 = vpop.permute.xlu0 %752
  %v755 = vmul.f32 %v745, %v753
  %757 = vrot.lane.b32.xlu0 %v755, 32
  %v758 = vpop.permute.xlu0 %757
  %v760 = vadd.f32 %v750, %v758
  %v761 = vtanh.pop %v760
  %763 = vrot.lane.b32.xlu0 %v761, 64
  %v764 = vpop.permute.xlu0 %763
  %v766 = vmul.f32 %v745, %v764
  %768 = vrot.lane.b32.xlu0 %v766, 32
  %v769 = vpop.permute.xlu0 %768
  %vm771 = vcmask 259077
  %772 = vst.msk [vmem:[#allocation2] sm:$0x20] %vm771, %v769
  %v773 = vrot.slane %v766, 5
  %774 = vrot.lane.b32.xlu0 %v773, 32
  %v775 = vpop.permute.xlu0 %774
  %v776 = vsel %vm111, %v775, 0
  %778 = vmatprep.subr.mxu0 0.0
  %779 = vmatpush1.msra.mxu0 %v107
  %780 = vmatprep.subr.mxu0 0.0
  %781 = vmatpush1.msra.mxu0 %v108
  %782 = vmatprep.subr.mxu0 0.0
  %783 = vmatpush1.msra.mxu0 %v109
  %784 = vmatprep.subr.mxu0 0.0
  %785 = vmatpush1.msra.mxu0 %v110
  %786 = vmatprep.subr.mxu0 0.0
  %787 = vmatpush1.msra.mxu0 0.0
  %788 = vmatprep.subr.mxu0 0.0
  %789 = vmatpush1.msra.mxu0 0.0
  %790 = vmatprep.subr.mxu0 0.0
  %791 = vmatpush1.msra.mxu0 0.0
  %792 = vmatprep.subr.mxu0 0.0
  %793 = vmatpush1.msra.mxu0 0.0
  %794 = vmatprep.subr.mxu0 0.0
  %795 = vmatpush1.msra.mxu0 0.0
  %796 = vmatprep.subr.mxu0 0.0
  %797 = vmatpush1.msra.mxu0 0.0
  %798 = vmatprep.subr.mxu0 0.0
  %799 = vmatpush1.msra.mxu0 0.0
  %800 = vmatprep.subr.mxu0 0.0
  %801 = vmatpush1.msra.mxu0 0.0
  %802 = vmatprep.subr.mxu0 0.0
  %803 = vmatpush1.msra.mxu0 0.0
  %804 = vmatprep.subr.mxu0 0.0
  %805 = vmatpush1.msra.mxu0 0.0
  %806 = vmatprep.subr.mxu0 0.0
  %807 = vmatpush1.msra.mxu0 0.0
  %808 = vmatprep.subr.mxu0 0.0
  %809 = vmatpush1.msra.mxu0 0.0
  %810 = vmatprep.subr.mxu0 0.0
  %811 = vmatpush1.msra.mxu0 0.0
  %812 = vmatprep.subr.mxu0 0.0
  %813 = vmatpush1.msra.mxu0 0.0
  %814 = vmatprep.subr.mxu0 0.0
  %815 = vmatpush1.msra.mxu0 0.0
  %816 = vmatprep.subr.mxu0 0.0
  %817 = vmatpush1.msra.mxu0 0.0
  %818 = vmatprep.subr.mxu0 0.0
  %819 = vmatpush1.msra.mxu0 0.0
  %820 = vmatprep.subr.mxu0 0.0
  %821 = vmatpush1.msra.mxu0 0.0
  %822 = vmatprep.subr.mxu0 0.0
  %823 = vmatpush1.msra.mxu0 0.0
  %824 = vmatprep.subr.mxu0 0.0
  %825 = vmatpush1.msra.mxu0 0.0
  %826 = vmatprep.subr.mxu0 0.0
  %827 = vmatpush1.msra.mxu0 0.0
  %828 = vmatprep.subr.mxu0 0.0
  %829 = vmatpush1.msra.mxu0 0.0
  %830 = vmatprep.subr.mxu0 0.0
  %831 = vmatpush1.msra.mxu0 0.0
  %832 = vmatprep.subr.mxu0 0.0
  %833 = vmatpush1.msra.mxu0 0.0
  %834 = vmatprep.subr.mxu0 0.0
  %835 = vmatpush1.msra.mxu0 0.0
  %836 = vmatprep.subr.mxu0 0.0
  %837 = vmatpush1.msra.mxu0 0.0
  %838 = vmatprep.subr.mxu0 0.0
  %839 = vmatpush1.msra.mxu0 0.0
  %840 = vmatprep.subr.mxu0 0.0
  %841 = vmatpush1.msra.mxu0 0.0
  %842 = vmatprep.mubr.f32.mxu0 0.0
  %843 = vmatmul.mubr.f32.gmra.mrb[0].mxu0 %v776
  %v844 = vpop.f32.mrb[0].mxu0
  %v845 = vadd.f32 0.0, %v844
  %v846 = vpop.f32.mrb[0].mxu0
  %847 = vdwg.mxu0
  %v849 = vrot.slane %v845, 2
  %v851 = vadd.f32 %v104, %v849
  %v852 = vxor.u32 %v851, 2147483648
  %v853 = vmul.f32 %v852, 1.442695
  %v854 = vpow.pop %v853
  %v855 = vadd.f32 %v854, 1.0
  %v856 = vrcp.pop %v855
  %v857 = vmul.f32 1.0, %v856
  %v858 = vtanh.pop %v851
  %v860 = vrot.slane %v760, 7
  %v862 = vmul.f32 %v857, %v860
  %864 = vrot.lane.b32.xlu0 %v858, 64
  %v865 = vpop.permute.xlu0 %864
  %v867 = vmul.f32 %v857, %v865
  %869 = vrot.lane.b32.xlu0 %v867, 32
  %v870 = vpop.permute.xlu0 %869
  %v872 = vadd.f32 %v862, %v870
  %v873 = vtanh.pop %v872
  %875 = vrot.lane.b32.xlu0 %v873, 64
  %v876 = vpop.permute.xlu0 %875
  %v878 = vmul.f32 %v857, %v876
  %880 = vrot.lane.b32.xlu0 %v878, 32
  %v881 = vpop.permute.xlu0 %880
  %vm883 = vcmask 260102
  %884 = vst.msk [vmem:[#allocation2] sm:$0x40] %vm883, %v881
  %v885 = vrot.slane %v878, 6
  %886 = vrot.lane.b32.xlu0 %v885, 32
  %v887 = vpop.permute.xlu0 %886
  %v888 = vsel %vm111, %v887, 0
  %890 = vmatprep.subr.mxu0 0.0
  %891 = vmatpush1.msra.mxu0 %v107
  %892 = vmatprep.subr.mxu0 0.0
  %893 = vmatpush1.msra.mxu0 %v108
  %894 = vmatprep.subr.mxu0 0.0
  %895 = vmatpush1.msra.mxu0 %v109
  %896 = vmatprep.subr.mxu0 0.0
  %897 = vmatpush1.msra.mxu0 %v110
  %898 = vmatprep.subr.mxu0 0.0
  %899 = vmatpush1.msra.mxu0 0.0
  %900 = vmatprep.subr.mxu0 0.0
  %901 = vmatpush1.msra.mxu0 0.0
  %902 = vmatprep.subr.mxu0 0.0
  %903 = vmatpush1.msra.mxu0 0.0
  %904 = vmatprep.subr.mxu0 0.0
  %905 = vmatpush1.msra.mxu0 0.0
  %906 = vmatprep.subr.mxu0 0.0
  %907 = vmatpush1.msra.mxu0 0.0
  %908 = vmatprep.subr.mxu0 0.0
  %909 = vmatpush1.msra.mxu0 0.0
  %910 = vmatprep.subr.mxu0 0.0
  %911 = vmatpush1.msra.mxu0 0.0
  %912 = vmatprep.subr.mxu0 0.0
  %913 = vmatpush1.msra.mxu0 0.0
  %914 = vmatprep.subr.mxu0 0.0
  %915 = vmatpush1.msra.mxu0 0.0
  %916 = vmatprep.subr.mxu0 0.0
  %917 = vmatpush1.msra.mxu0 0.0
  %918 = vmatprep.subr.mxu0 0.0
  %919 = vmatpush1.msra.mxu0 0.0
  %920 = vmatprep.subr.mxu0 0.0
  %921 = vmatpush1.msra.mxu0 0.0
  %922 = vmatprep.subr.mxu0 0.0
  %923 = vmatpush1.msra.mxu0 0.0
  %924 = vmatprep.subr.mxu0 0.0
  %925 = vmatpush1.msra.mxu0 0.0
  %926 = vmatprep.subr.mxu0 0.0
  %927 = vmatpush1.msra.mxu0 0.0
  %928 = vmatprep.subr.mxu0 0.0
  %929 = vmatpush1.msra.mxu0 0.0
  %930 = vmatprep.subr.mxu0 0.0
  %931 = vmatpush1.msra.mxu0 0.0
  %932 = vmatprep.subr.mxu0 0.0
  %933 = vmatpush1.msra.mxu0 0.0
  %934 = vmatprep.subr.mxu0 0.0
  %935 = vmatpush1.msra.mxu0 0.0
  %936 = vmatprep.subr.mxu0 0.0
  %937 = vmatpush1.msra.mxu0 0.0
  %938 = vmatprep.subr.mxu0 0.0
  %939 = vmatpush1.msra.mxu0 0.0
  %940 = vmatprep.subr.mxu0 0.0
  %941 = vmatpush1.msra.mxu0 0.0
  %942 = vmatprep.subr.mxu0 0.0
  %943 = vmatpush1.msra.mxu0 0.0
  %944 = vmatprep.subr.mxu0 0.0
  %945 = vmatpush1.msra.mxu0 0.0
  %946 = vmatprep.subr.mxu0 0.0
  %947 = vmatpush1.msra.mxu0 0.0
  %948 = vmatprep.subr.mxu0 0.0
  %949 = vmatpush1.msra.mxu0 0.0
  %950 = vmatprep.subr.mxu0 0.0
  %951 = vmatpush1.msra.mxu0 0.0
  %952 = vmatprep.subr.mxu0 0.0
  %953 = vmatpush1.msra.mxu0 0.0
  %954 = vmatprep.mubr.f32.mxu0 0.0
  %955 = vmatmul.mubr.f32.gmra.mrb[0].mxu0 %v888
  %v956 = vpop.f32.mrb[0].mxu0
  %v957 = vadd.f32 0.0, %v956
  %v958 = vpop.f32.mrb[0].mxu0
  %959 = vdwg.mxu0
  %v961 = vrot.slane %v957, 1
  %v963 = vadd.f32 %v104, %v961
  %v964 = vxor.u32 %v963, 2147483648
  %v965 = vmul.f32 %v964, 1.442695
  %v966 = vpow.pop %v965
  %v967 = vadd.f32 %v966, 1.0
  %v968 = vrcp.pop %v967
  %v969 = vmul.f32 1.0, %v968
  %v970 = vtanh.pop %v963
  %v972 = vrot.slane %v872, 7
  %v974 = vmul.f32 %v969, %v972
  %976 = vrot.lane.b32.xlu0 %v970, 64
  %v977 = vpop.permute.xlu0 %976
  %v979 = vmul.f32 %v969, %v977
  %981 = vrot.lane.b32.xlu0 %v979, 32
  %v982 = vpop.permute.xlu0 %981
  %v984 = vadd.f32 %v974, %v982
  %v985 = vtanh.pop %v984
  %987 = vrot.lane.b32.xlu0 %v985, 64
  %v988 = vpop.permute.xlu0 %987
  %v990 = vmul.f32 %v969, %v988
  %992 = vrot.lane.b32.xlu0 %v990, 32
  %v993 = vpop.permute.xlu0 %992
  %vm995 = vcmask 261127
  %996 = vst.msk [vmem:[#allocation2] sm:$0x80] %vm995, %v993
  %v997 = vld [vmem:[#allocation2] sm:$0xff]
  %v998 = vld [vmem:[%s4] sm:$0xff]
  %v999 = vld [vmem:[%s4 + $0x8] sm:$0xff]
  %v1000 = vld [vmem:[%s4 + $0x10] sm:$0xff]
  %v1001 = vld [vmem:[%s4 + $0x18] sm:$0xff]
  %v1002 = vld [vmem:[%s5] sm:$0x1]
  %v1004 = vlaneseq
  %v1005 = vshrl.u32 %v1004, 7
  %v1006 = vsub.s32 0, %v1005
  %v1007 = vrot.slane %v1002, %v1006
  %v1010 = vsel %vm111, %v997, 0
  %1012 = vmatprep.subr.mxu0 0.0
  %1013 = vmatpush1.msra.mxu0 %v998
  %1014 = vmatprep.subr.mxu0 0.0
  %1015 = vmatpush1.msra.mxu0 %v999
  %1016 = vmatprep.subr.mxu0 0.0
  %1017 = vmatpush1.msra.mxu0 %v1000
  %1018 = vmatprep.subr.mxu0 0.0
  %1019 = vmatpush1.msra.mxu0 %v1001
  %1020 = vmatprep.subr.mxu0 0.0
  %1021 = vmatpush1.msra.mxu0 0.0
  %1022 = vmatprep.subr.mxu0 0.0
  %1023 = vmatpush1.msra.mxu0 0.0
  %1024 = vmatprep.subr.mxu0 0.0
  %1025 = vmatpush1.msra.mxu0 0.0
  %1026 = vmatprep.subr.mxu0 0.0
  %1027 = vmatpush1.msra.mxu0 0.0
  %1028 = vmatprep.subr.mxu0 0.0
  %1029 = vmatpush1.msra.mxu0 0.0
  %1030 = vmatprep.subr.mxu0 0.0
  %1031 = vmatpush1.msra.mxu0 0.0
  %1032 = vmatprep.subr.mxu0 0.0
  %1033 = vmatpush1.msra.mxu0 0.0
  %1034 = vmatprep.subr.mxu0 0.0
  %1035 = vmatpush1.msra.mxu0 0.0
  %1036 = vmatprep.subr.mxu0 0.0
  %1037 = vmatpush1.msra.mxu0 0.0
  %1038 = vmatprep.subr.mxu0 0.0
  %1039 = vmatpush1.msra.mxu0 0.0
  %1040 = vmatprep.subr.mxu0 0.0
  %1041 = vmatpush1.msra.mxu0 0.0
  %1042 = vmatprep.subr.mxu0 0.0
  %1043 = vmatpush1.msra.mxu0 0.0
  %1044 = vmatprep.subr.mxu0 0.0
  %1045 = vmatpush1.msra.mxu0 0.0
  %1046 = vmatprep.subr.mxu0 0.0
  %1047 = vmatpush1.msra.mxu0 0.0
  %1048 = vmatprep.subr.mxu0 0.0
  %1049 = vmatpush1.msra.mxu0 0.0
  %1050 = vmatprep.subr.mxu0 0.0
  %1051 = vmatpush1.msra.mxu0 0.0
  %1052 = vmatprep.subr.mxu0 0.0
  %1053 = vmatpush1.msra.mxu0 0.0
  %1054 = vmatprep.subr.mxu0 0.0
  %1055 = vmatpush1.msra.mxu0 0.0
  %1056 = vmatprep.subr.mxu0 0.0
  %1057 = vmatpush1.msra.mxu0 0.0
  %1058 = vmatprep.subr.mxu0 0.0
  %1059 = vmatpush1.msra.mxu0 0.0
  %1060 = vmatprep.subr.mxu0 0.0
  %1061 = vmatpush1.msra.mxu0 0.0
  %1062 = vmatprep.subr.mxu0 0.0
  %1063 = vmatpush1.msra.mxu0 0.0
  %1064 = vmatprep.subr.mxu0 0.0
  %1065 = vmatpush1.msra.mxu0 0.0
  %1066 = vmatprep.subr.mxu0 0.0
  %1067 = vmatpush1.msra.mxu0 0.0
  %1068 = vmatprep.subr.mxu0 0.0
  %1069 = vmatpush1.msra.mxu0 0.0
  %1070 = vmatprep.subr.mxu0 0.0
  %1071 = vmatpush1.msra.mxu0 0.0
  %1072 = vmatprep.subr.mxu0 0.0
  %1073 = vmatpush1.msra.mxu0 0.0
  %1074 = vmatprep.subr.mxu0 0.0
  %1075 = vmatpush1.msra.mxu0 0.0
  %1076 = vmatprep.mubr.f32.mxu0 0.0
  %1077 = vmatmul.mubr.f32.gmra.mrb[0].mxu0 %v1010
  %v1078 = vpop.f32.mrb[0].mxu0
  %v1079 = vadd.f32 %v1007, %v1078
  %v1080 = vpop.f32.mrb[0].mxu0
  %1081 = vdwg.mxu0
  %1082 = vst [vmem:[%s6] sm:$0xff] %v1079
  // Predicated region
  $region26: #{lstm_classification_head.1} parent=0 // pred_check
    _
  $region27: #{lstm_classification_head.1} parent=0 // pred_check_branch
    %1084 = sbr.rel (0) target = $region29
  $region28: #{lstm_classification_head.1} parent=0 // pred_region
    _
  $region29: #{lstm_classification_head.1} parent=0 // pred_fallthru
    _
  // Predicated region
  $region30: #{lstm_classification_head.1} parent=0 // pred_check
    _
  $region31: #{lstm_classification_head.1} parent=0 // pred_check_branch
    %1086 = sbr.rel (0) target = $region33
  $region32: #{lstm_classification_head.1} parent=0 // pred_region
    _
  $region33: #{lstm_classification_head.1} parent=0 // pred_fallthru
    _

</llo_original>
